<compile_context>
chip_gen: v7x
topology: tpu7x:2x2x1
jax: 0.10.0
libtpu: 0.0.40
codegen_flags: <defaults>
</compile_context>

<pallas_src>
import jax
import jax.numpy as jnp
from jax.experimental import pallas as pl
from jax.experimental.pallas import tpu as pltpu


# ---------------------------------------------------------------------------
# Glue: 1-D bilinear interpolation matrix matching
# F.interpolate(..., mode='bilinear', align_corners=False) along one axis.
# ---------------------------------------------------------------------------
def _bilinear_matrix(out_size: int, in_size: int) -> jnp.ndarray:
    scale = in_size / out_size
    dst = jnp.arange(out_size, dtype=jnp.float32)
    src = (dst + 0.5) * scale - 0.5
    # PyTorch clamps negative source coords to 0 when align_corners=False.
    src = jnp.maximum(src, 0.0)
    i0 = jnp.clip(jnp.floor(src).astype(jnp.int32), 0, in_size - 1)
    i1 = jnp.minimum(i0 + 1, in_size - 1)
    frac = src - i0.astype(jnp.float32)
    w = jnp.zeros((out_size, in_size), dtype=jnp.float32)
    w = w.at[jnp.arange(out_size), i0].add(1.0 - frac)
    w = w.at[jnp.arange(out_size), i1].add(frac)
    return w


# ---------------------------------------------------------------------------
# Pallas kernel: lane-dense broadcast add of the (already resized) bias row.
# ---------------------------------------------------------------------------
def _bias_add_kernel(interp_ref, x_ref, o_ref):
    # interp_ref: (1, lane)      -- implicit sublane broadcast over the rows.
    # x_ref/o_ref: (rows, lane)  -- fully packed lane-dense tiles.
    o_ref[...] = (x_ref[...] + interp_ref[...]).astype(o_ref.dtype)


# ---------------------------------------------------------------------------
# Tiling heuristics.
# ---------------------------------------------------------------------------
def _device_kind() -> str:
    try:
        return jax.devices()[0].device_kind.lower()
    except Exception:
        return ""


def _block_budget_bytes(kind: str) -> int:
    # v5e: ~0.82 TB/s HBM, 1 TC -> 2 MiB blocks are already near roofline.
    if "v5 lite" in kind or "v5lite" in kind or "v5e" in kind:
        return 2 << 20
    # v7x: 3.2 TB/s HBM -> bigger blocks amortize the ~0.35us/step overhead.
    if "v7" in kind:
        return 6 << 20
    # v6e and unknown chips (vmem_limit_bytes is set explicitly below, so the
    # 4 MiB fallback is safe even on chips with a small default scoped VMEM).
    return 4 << 20


def _largest_divisor_leq(n: int, max_val: int, align: int) -> int:
    best_aligned, best_any = 0, 1
    for d in range(1, n + 1):
        if n % d or d > max_val:
            continue
        best_any = d
        if d % align == 0:
            best_aligned = d
    return best_aligned if best_aligned else best_any


def _pick_tiles_2d(n: int, d: int, itemsize: int, budget: int, two_cores: bool):
    """Pick a (rows, lane) block for an (n, d) array.

    rows is a multiple of the sublane packing (8 f32 / 16 bf16) or == n;
    lane is a multiple of 128 or == d (the (8,128) block rule).
    """
    row_align = 16 if itemsize == 2 else 8

    # Lane tile: keep the whole row when it fits the budget (or it cannot be
    # split on a 128 boundary); otherwise the largest 128-multiple divisor of
    # d such that a fully packed row-group still fits the budget.
    if d * itemsize <= budget or d % 128 != 0:
        lane = d
    else:
        lane = 128
        target = max(128, budget // (row_align * itemsize))
        cand = 128
        while cand <= d:
            if d % cand == 0 and cand <= target:
                lane = cand
            cand += 128

    # Row tile.
    max_rows = max(1, budget // (lane * itemsize))
    if n <= max_rows:
        rows = n
    else:
        rows = _largest_divisor_leq(n, max_rows, row_align)

    # v7x megacore: prefer >=4 total grid steps (>=2 pipelined blocks per
    # TensorCore) once the problem is big enough to be worth splitting.
    if two_cores and n * d * itemsize >= (4 << 20):
        if (d // lane) * (n // rows) < 4:
            for cand in sorted((x for x in range(1, rows) if n % x == 0),
                               reverse=True):
                if cand % row_align:
                    continue
                if (d // lane) * (n // cand) >= 4:
                    rows = cand
                    break
    return rows, lane


# ---------------------------------------------------------------------------
# Forward wrapper.
# ---------------------------------------------------------------------------
def ul2ptq2_forward(output: jnp.ndarray, bias: jnp.ndarray) -> jnp.ndarray:
    """output: (N, C, H, W); bias: (1, C, Hf, Wf). Returns output + resized bias."""
    n, c, h, w = output.shape
    b1, cb, hf, wf = bias.shape
    assert b1 == 1 and cb == c
    d = c * h * w

    # --- One-time, batch-independent bias resize (plain JAX glue). ----------
    wh = _bilinear_matrix(h, hf)   # (H, Hf)
    ww = _bilinear_matrix(w, wf)   # (W, Wf)
    interp = jnp.einsum("Hh,chw,Ww->cHW", wh, bias[0].astype(jnp.float32), ww)
    # F.interpolate preserves the bias dtype; the add then follows PyTorch
    # type promotion (e.g. bf16 activation + f32 bias -> f32 result).
    interp = interp.astype(bias.dtype).reshape(1, d)
    res_dtype = jnp.promote_types(output.dtype, bias.dtype)

    # --- Lane-dense 2-D layout: (N, C*H*W). ----------------------------------
    x = output.reshape(n, d)

    kind = _device_kind()
    x_item = jnp.dtype(output.dtype).itemsize
    o_item = jnp.dtype(res_dtype).itemsize
    b_item = jnp.dtype(interp.dtype).itemsize
    budget = _block_budget_bytes(kind)
    rows, lane = _pick_tiles_2d(n, d, max(x_item, o_item), budget,
                                two_cores=("v7" in kind))
    # Batch axis innermost -> the bias block index only changes on the outer
    # (lane) axis and stays resident across consecutive batch steps.
    grid = (d // lane, n // rows)

    # Explicit scoped-VMEM limit: double-buffered in/out blocks + bias row +
    # headroom, capped at 48 MiB (safe under v7x's 64 MiB physical VMEM).
    blk_bytes = rows * lane * (x_item + o_item) + lane * b_item
    vmem_limit = int(min(48 << 20, max(32 << 20, 2 * blk_bytes + (4 << 20))))

    cost = pl.CostEstimate(
        flops=n * d,                    # one add per output element
        transcendentals=0,
        bytes_accessed=n * d * (x_item + o_item) + d * b_item,
    )

    extra_kwargs = {}
    if res_dtype == x.dtype:
        # In-place broadcast add: alias the activation input to the output so
        # XLA can reuse / donate the buffer (no extra output allocation).
        extra_kwargs["input_output_aliases"] = {1: 0}

    y = pl.pallas_call(
        _bias_add_kernel,
        out_shape=jax.ShapeDtypeStruct((n, d), res_dtype),
        grid_spec=pltpu.PrefetchScalarGridSpec(
            num_scalar_prefetch=0,
            grid=grid,
            in_specs=[
                # resized bias row: block index constant across the inner
                # (batch) grid axis.
                pl.BlockSpec((1, lane), lambda dj, bi: (0, dj)),
                # activation tile
                pl.BlockSpec((rows, lane), lambda dj, bi: (bi, dj)),
            ],
            out_specs=pl.BlockSpec((rows, lane), lambda dj, bi: (bi, dj)),
        ),
        compiler_params=pltpu.CompilerParams(
            dimension_semantics=("parallel", "parallel"),
            vmem_limit_bytes=vmem_limit,
        ),
        cost_estimate=cost,
        **extra_kwargs,
    )(interp, x)

    return y.reshape(n, c, h, w)


# ---------------------------------------------------------------------------
# Pure-JAX reference (same math) for a sanity check.
# ---------------------------------------------------------------------------
def _reference(output, bias):
    _, _, h, w = output.shape
    _, _, hf, wf = bias.shape
    wh = _bilinear_matrix(h, hf)
    ww = _bilinear_matrix(w, wf)
    interp = jnp.einsum("Hh,chw,Ww->cHW", wh, bias[0], ww)
    return output + interp[None]


if __name__ == "__main__":
    # Module config: channel_size=4, feature_size=(8, 8); input is NCHW.
    channel_size = 4
    feature_size = (8, 8)

    key = jax.random.PRNGKey(0)
    k_out, k_bias = jax.random.split(key)

    # Example "output" activation fed to forward().
    x = jax.random.normal(k_out, (2, channel_size, 16, 16), dtype=jnp.float32)
    # Module registers bias as zeros; use a deterministic nonzero bias so the
    # interpolation path is actually exercised.
    bias = jax.random.normal(
        k_bias, (1, channel_size) + feature_size, dtype=jnp.float32
    )

    # Compute the reference first (the kernel aliases x to its output).
    y_ref = _reference(x, bias)

    y = jax.jit(ul2ptq2_forward)(x, bias)
    y = jax.block_until_ready(y)

    assert y.shape == x.shape
    assert jnp.max(jnp.abs(y - y_ref)) < 1e-5

    print("KERNEL_OK")
</pallas_src>

<mosaic_0001>
module attributes {stable_mosaic.version = 11 : i64} {
  func.func private @main(%arg0: i32) attributes {dimension_semantics = [#tpu.dimension_semantics<core_parallel>], iteration_bounds = array<i64: 2>, tpu.core_type = #tpu.core_type<sc_scalar_subcore>, window_params = []} {
    return
  }
}

module attributes {stable_mosaic.version = 11 : i64} {
  func.func private @main(%arg0: i32) attributes {dimension_semantics = [#tpu.dimension_semantics<core_parallel>], iteration_bounds = array<i64: 2>, tpu.core_type = #tpu.core_type<sc_scalar_subcore>, window_params = []} {
    return
  }
}

module attributes {stable_mosaic.version = 11 : i64} {
  func.func @_bias_add_kernel(%arg0: i32, %arg1: i32, %arg2: memref<1x1024xf32, #tpu.memory_space<vmem>>, %arg3: memref<2x1024xf32, #tpu.memory_space<vmem>>, %arg4: memref<2x1024xf32, #tpu.memory_space<vmem>>) attributes {dimension_semantics = [#tpu.dimension_semantics<parallel>, #tpu.dimension_semantics<parallel>], iteration_bounds = array<i64: 1, 1>, scalar_prefetch = 0 : i64, scratch_operands = 0 : i64, tpu.core_type = #tpu.core_type<tc>, window_params = [{transform_indices = @transform_0, window_bounds = array<i64: 1, 1024>}, {transform_indices = @transform_1, window_bounds = array<i64: 2, 1024>}, {transform_indices = @transform_2, window_bounds = array<i64: 2, 1024>}]} {
    %c0 = arith.constant 0 : index
    %c0_0 = arith.constant 0 : index
    %0 = vector.load %arg3[%c0, %c0_0] : memref<2x1024xf32, #tpu.memory_space<vmem>>, vector<2x1024xf32>
    %c0_1 = arith.constant 0 : index
    %c0_2 = arith.constant 0 : index
    %1 = vector.load %arg2[%c0_1, %c0_2] : memref<1x1024xf32, #tpu.memory_space<vmem>>, vector<1x1024xf32>
    %2 = vector.broadcast %1 : vector<1x1024xf32> to vector<2x1024xf32>
    %3 = arith.addf %0, %2 : vector<2x1024xf32>
    %c0_3 = arith.constant 0 : index
    %c0_4 = arith.constant 0 : index
    %4 = vector.load %arg4[%c0_3, %c0_4] : memref<2x1024xf32, #tpu.memory_space<vmem>>, vector<2x1024xf32>
    tpu.vector_store %arg4[%c0_3, %c0_4], %3 {strides = array<i32>} : memref<2x1024xf32, #tpu.memory_space<vmem>>, vector<2x1024xf32>,
    return
  }
  func.func @transform_0(%arg0: i32, %arg1: i32) -> (i32, i32) {
    %c0_i32 = arith.constant 0 : i32
    %c0_i32_0 = arith.constant 0 : i32
    return %c0_i32, %arg0 : i32, i32
  }
  func.func @transform_1(%arg0: i32, %arg1: i32) -> (i32, i32) {
    %c0_i32 = arith.constant 0 : i32
    return %arg1, %arg0 : i32, i32
  }
  func.func @transform_2(%arg0: i32, %arg1: i32) -> (i32, i32) {
    %c0_i32 = arith.constant 0 : i32
    return %arg1, %arg0 : i32, i32
  }
}

</mosaic_0001>

<llo_original>
// kernel: ul2ptq2_forward.1
$region0: #{ul2ptq2_forward.1}
  #allocation0 [shape = 'u32[]', space=smem, size = 0x4, offset = 0x4, fixed_abs, tag = 'smem constant byte address 0x4 - core index']
  #allocation1 [shape = 'u32[144,128]{1,0:T(1,128)}', space=vmem, size = 0x12000, scoped, tag = 'internal scratch']
  %s0 = inlined_call_operand.vmem [shape: f32[1,1024], index: 0, kind: input, shape index: {}]
  %s1 = inlined_call_operand.vmem [shape: f32[2,1024], index: 1, kind: input, shape index: {}, may-alias: {1,2}]
  %s2 = inlined_call_operand.vmem [shape: f32[2,1024], index: 2, kind: output, shape index: {}, may-alias: {1,2}]
  %s3 = sld [smem:[#allocation0]]
  $region18: #{ul2ptq2_forward.1} parent=0
    _
  %s5 = ssub.s32 1, %s3
  %s6 = scalar_select 0, %s5, %s3
  // Predicated region
  $region2: #{ul2ptq2_forward.1} parent=0 // pred_check
    _
  $region3: #{ul2ptq2_forward.1} parent=0 // pred_check_branch
    %8 = sbr.rel (0) target = $region5
  $region4: #{ul2ptq2_forward.1} parent=0 // pred_region
    _
  $region5: #{ul2ptq2_forward.1} parent=0 // pred_fallthru
    _
  // Predicated region
  $region6: #{ul2ptq2_forward.1} parent=0 // pred_check
    _
  $region7: #{ul2ptq2_forward.1} parent=0 // pred_check_branch
    %10 = sbr.rel (0) target = $region9
  $region8: #{ul2ptq2_forward.1} parent=0 // pred_region
    _
  $region9: #{ul2ptq2_forward.1} parent=0 // pred_fallthru
    _
  %v11 = vld [vmem:[%s1] sm:$0xff]
  %v12 = vld [vmem:[%s1 + $0x8] sm:$0xff]
  %v13 = vld [vmem:[%s0] sm:$0xff]
  %v15 = vlaneseq
  %v16 = vshrl.u32 %v15, 7
  %v17 = vsub.s32 0, %v16
  %v18 = vrot.slane %v13, %v17
  %v19 = vlaneseq
  %v20 = vshrl.u32 %v19, 7
  %v21 = vsub.s32 1, %v20
  %v22 = vrot.slane %v13, %v21
  %v23 = vlaneseq
  %v24 = vshrl.u32 %v23, 7
  %v25 = vsub.s32 2, %v24
  %v26 = vrot.slane %v13, %v25
  %v27 = vlaneseq
  %v28 = vshrl.u32 %v27, 7
  %v29 = vsub.s32 3, %v28
  %v30 = vrot.slane %v13, %v29
  %v31 = vlaneseq
  %v32 = vshrl.u32 %v31, 7
  %v33 = vsub.s32 4, %v32
  %v34 = vrot.slane %v13, %v33
  %v35 = vlaneseq
  %v36 = vshrl.u32 %v35, 7
  %v37 = vsub.s32 5, %v36
  %v38 = vrot.slane %v13, %v37
  %v39 = vlaneseq
  %v40 = vshrl.u32 %v39, 7
  %v41 = vsub.s32 6, %v40
  %v42 = vrot.slane %v13, %v41
  %v43 = vlaneseq
  %v44 = vshrl.u32 %v43, 7
  %v45 = vsub.s32 7, %v44
  %v46 = vrot.slane %v13, %v45
  %v47 = vcombine.low %v18, %v22
  %v48 = vcombine.low %v26, %v30
  %v50 = vunpack.c.l.s4 1983009808
  %v51 = vunpack.c.0.s8 %v50
  %v52 = vlaneseq
  %v53 = vshrl.u32 %v52, 7
  %v54 = vsub.s32 %v51, %v53
  %v55 = vrot.slane %v47, %v54
  %v57 = vunpack.c.l.s4 1983009808
  %v58 = vunpack.c.0.s8 %v57
  %v59 = vlaneseq
  %v60 = vshrl.u32 %v59, 7
  %v61 = vsub.s32 %v58, %v60
  %v62 = vrot.slane %v48, %v61
  %v63 = vcombine.low %v55, %v62
  %v64 = vcombine.low %v34, %v38
  %v65 = vcombine.low %v42, %v46
  %v67 = vunpack.c.l.s4 1983009808
  %v68 = vunpack.c.0.s8 %v67
  %v69 = vlaneseq
  %v70 = vshrl.u32 %v69, 7
  %v71 = vsub.s32 %v68, %v70
  %v72 = vrot.slane %v64, %v71
  %v74 = vunpack.c.l.s4 1983009808
  %v75 = vunpack.c.0.s8 %v74
  %v76 = vlaneseq
  %v77 = vshrl.u32 %v76, 7
  %v78 = vsub.s32 %v75, %v77
  %v79 = vrot.slane %v65, %v78
  %v80 = vcombine.low %v72, %v79
  %v83 = vadd.f32 %v11, %v63
  %v84 = vadd.f32 %v12, %v80
  %85 = vst [vmem:[%s2] sm:$0xff] %v83
  %86 = vst [vmem:[%s2 + $0x8] sm:$0xff] %v84
  // Predicated region
  $region10: #{ul2ptq2_forward.1} parent=0 // pred_check
    _
  $region11: #{ul2ptq2_forward.1} parent=0 // pred_check_branch
    %88 = sbr.rel (0) target = $region13
  $region12: #{ul2ptq2_forward.1} parent=0 // pred_region
    _
  $region13: #{ul2ptq2_forward.1} parent=0 // pred_fallthru
    _
  // Predicated region
  $region14: #{ul2ptq2_forward.1} parent=0 // pred_check
    _
  $region15: #{ul2ptq2_forward.1} parent=0 // pred_check_branch
    %90 = sbr.rel (0) target = $region17
  $region16: #{ul2ptq2_forward.1} parent=0 // pred_region
    _
  $region17: #{ul2ptq2_forward.1} parent=0 // pred_fallthru
    _

</llo_original>
